<compile_context>
chip_gen: v6e
topology: v6e:2x2x1
jax: 0.10.0
libtpu: 0.0.40
codegen_flags: <defaults>
</compile_context>

<pallas_src>
import jax
import jax.numpy as jnp
from jax.experimental import pallas as pl
from jax.experimental.pallas import tpu as pltpu

H1 = 128          # fc1 output features
H2 = 256          # fc2 output features
PAD_OUT = 128     # lane-dense padded width for fc3 output


def _round_up(n, m):
    return ((n + m - 1) // m) * m


def _default_act_dtype():
    """bf16 sigmoid math on v6e/v7x (packed bf16 VPU/EUP); f32 on older chips."""
    try:
        kind = jax.devices()[0].device_kind.lower()
    except Exception:
        return jnp.float32
    if any(tag in kind for tag in ("v2", "v3", "v4", "v5")):
        return jnp.float32
    return jnp.bfloat16


def _make_mlp_kernel(act_dtype):
    def mlp_kernel(x_ref, w1_ref, b1_ref, w2_ref, b2_ref, w3_ref, b3_ref, o_ref):
        # x tile: (TB, D_in) f32; weights bf16, pre-transposed (in, out); biases f32.
        xb = x_ref[...].astype(w1_ref.dtype)

        # fc1 + sigmoid  (MXU bf16 / f32 accumulate; sigmoid via single-EUP tanh)
        h1 = jnp.dot(xb, w1_ref[...], preferred_element_type=jnp.float32) + b1_ref[...]
        h1 = h1.astype(act_dtype)
        a1 = (jnp.tanh(h1 * 0.5) * 0.5 + 0.5).astype(w2_ref.dtype)

        # fc2 + sigmoid
        h2 = jnp.dot(a1, w2_ref[...], preferred_element_type=jnp.float32) + b2_ref[...]
        h2 = h2.astype(act_dtype)
        a2 = (jnp.tanh(h2 * 0.5) * 0.5 + 0.5).astype(w3_ref.dtype)

        # fc3 logits -> lane-dense (TB, 128) bf16 slab (cols >= n_classes are zero-padded)
        o_ref[...] = (jnp.dot(a2, w3_ref[...], preferred_element_type=jnp.float32)
                      + b3_ref[...]).astype(o_ref.dtype)

    return mlp_kernel


def prepare_params(params):
    """One-time param prep: pad fc3 to a lane-dense 128-wide output, cast weights to bf16.

    Hoisted out of the per-call forward so the pad/casts don't run every step.
    """
    w3, b3 = params["w3"], params["b3"]
    n_classes = w3.shape[1]
    w3p = jnp.zeros((H2, PAD_OUT), jnp.float32).at[:, :n_classes].set(w3)
    b3p = jnp.zeros((1, PAD_OUT), jnp.float32).at[:, :n_classes].set(b3)
    return {
        "w1": params["w1"].astype(jnp.bfloat16),
        "b1": params["b1"],
        "w2": params["w2"].astype(jnp.bfloat16),
        "b2": params["b2"],
        "w3": w3p.astype(jnp.bfloat16),
        "b3": b3p,
        "n_classes": n_classes,
    }


def linear_classifier_forward(x, prep, *, block_b=1024, act_dtype=None):
    """x: (B, input_dims) f32.  prep: output of prepare_params().  Returns f32 logits."""
    if act_dtype is None:
        act_dtype = _default_act_dtype()

    w1, b1 = prep["w1"], prep["b1"]
    w2, b2 = prep["w2"], prep["b2"]
    w3, b3 = prep["w3"], prep["b3"]
    n_classes = prep["n_classes"]

    B, D = x.shape

    # Batch tile: multiple of 8, capped by block_b, and capped so the grid has >=2 steps
    # whenever B allows it (v7x two-TensorCore sharding via "parallel" semantics).
    tb_cap = _round_up(B, 8)
    if B > 8:
        tb_cap = min(tb_cap, _round_up((B + 1) // 2, 8))
    tb = min(block_b, tb_cap)
    Bp = _round_up(B, tb)
    if Bp != B:
        x = jnp.pad(x, ((0, Bp - B), (0, 0)))
    grid = (Bp // tb,)

    in_specs = [
        pl.BlockSpec((tb, D), lambda i: (i, 0)),        # x        : batch-tiled
        pl.BlockSpec((D, H1), lambda i: (0, 0)),        # w1       : VMEM-resident
        pl.BlockSpec((1, H1), lambda i: (0, 0)),        # b1       : VMEM-resident
        pl.BlockSpec((H1, H2), lambda i: (0, 0)),       # w2       : VMEM-resident
        pl.BlockSpec((1, H2), lambda i: (0, 0)),        # b2       : VMEM-resident
        pl.BlockSpec((H2, PAD_OUT), lambda i: (0, 0)),  # w3 (pad) : VMEM-resident
        pl.BlockSpec((1, PAD_OUT), lambda i: (0, 0)),   # b3 (pad) : VMEM-resident
    ]
    out_specs = pl.BlockSpec((tb, PAD_OUT), lambda i: (i, 0))

    flops = 2 * Bp * (D * H1 + H1 * H2 + H2 * PAD_OUT)
    bytes_accessed = (
        Bp * D * 4                                       # x (f32 in HBM)
        + (D * H1 + H1 * H2 + H2 * PAD_OUT) * 2          # bf16 weights
        + (H1 + H2 + PAD_OUT) * 4                        # f32 biases
        + Bp * PAD_OUT * 2                               # bf16 output
    )
    cost = pl.CostEstimate(flops=flops,
                           transcendentals=Bp * (H1 + H2),   # one tanh per activation
                           bytes_accessed=bytes_accessed)

    out_padded = pl.pallas_call(
        _make_mlp_kernel(act_dtype),
        out_shape=jax.ShapeDtypeStruct((Bp, PAD_OUT), jnp.bfloat16),
        grid=grid,
        in_specs=in_specs,
        out_specs=out_specs,
        compiler_params=pltpu.CompilerParams(
            dimension_semantics=("parallel",),
            vmem_limit_bytes=32 * 1024 * 1024,
        ),
        cost_estimate=cost,
    )(x, w1, b1, w2, b2, w3, b3)

    return out_padded[:B, :n_classes].astype(jnp.float32)


def init_params(key, input_dims, n_classes):
    """Deterministic init mirroring nn.Linear shapes (weights stored as (in, out), f32)."""
    ks = jax.random.split(key, 6)

    def lin(kw, kb, fan_in, fan_out):
        bound = 1.0 / jnp.sqrt(fan_in)
        w = jax.random.uniform(kw, (fan_in, fan_out), jnp.float32, -bound, bound)
        b = jax.random.uniform(kb, (1, fan_out), jnp.float32, -bound, bound)
        return w, b

    w1, b1 = lin(ks[0], ks[1], input_dims, H1)
    w2, b2 = lin(ks[2], ks[3], H1, H2)
    w3, b3 = lin(ks[4], ks[5], H2, n_classes)
    return {"w1": w1, "b1": b1, "w2": w2, "b2": b2, "w3": w3, "b3": b3}


def ref_forward(x, params):
    """Pure-JAX reference matching the kernel matmul math (bf16 dot inputs, f32 accum)."""
    bf = jnp.bfloat16
    h1 = jax.nn.sigmoid(
        jnp.dot(x.astype(bf), params["w1"].astype(bf),
                preferred_element_type=jnp.float32) + params["b1"])
    h2 = jax.nn.sigmoid(
        jnp.dot(h1.astype(bf), params["w2"].astype(bf),
                preferred_element_type=jnp.float32) + params["b2"])
    return jnp.dot(h2.astype(bf), params["w3"].astype(bf),
                   preferred_element_type=jnp.float32) + params["b3"]


if __name__ == "__main__":
    key = jax.random.PRNGKey(0)
    k_x, k_p = jax.random.split(key)

    batch = 8
    input_dims = 32   # LinearClassifier(input_dims=(32,))
    n_classes = 10

    x = jax.random.normal(k_x, (batch, input_dims), jnp.float32)
    params = init_params(k_p, input_dims, n_classes)
    prep = prepare_params(params)   # one-time bf16 cast + lane-dense fc3 padding

    out = linear_classifier_forward(x, prep)
    out = jax.block_until_ready(out)
    assert out.shape == (batch, n_classes)

    # Reference check (same bf16-matmul / f32-accumulate math; exact sigmoid).
    # Tolerance covers bf16 activations / bf16 output rounding and the tanh-form sigmoid.
    ref = ref_forward(x, params)
    assert jnp.allclose(out, ref, atol=3e-2, rtol=3e-2), (
        f"max abs err {jnp.max(jnp.abs(out - ref))}")

    # Also sanity-check against the pure-f32 PyTorch-equivalent forward.
    h1 = jax.nn.sigmoid(x @ params["w1"] + params["b1"])
    h2 = jax.nn.sigmoid(h1 @ params["w2"] + params["b2"])
    ref_f32 = h2 @ params["w3"] + params["b3"]
    assert jnp.allclose(out, ref_f32, atol=6e-2, rtol=6e-2), (
        f"max abs err {jnp.max(jnp.abs(out - ref_f32))}")

    print("KERNEL_OK")
</pallas_src>

<mosaic_0001>
module attributes {stable_mosaic.version = 11 : i64} {
  func.func @mlp_kernel(%arg0: i32, %arg1: memref<8x32xf32, #tpu.memory_space<vmem>>, %arg2: memref<32x128xbf16, #tpu.memory_space<vmem>>, %arg3: memref<1x128xf32, #tpu.memory_space<vmem>>, %arg4: memref<128x256xbf16, #tpu.memory_space<vmem>>, %arg5: memref<1x256xf32, #tpu.memory_space<vmem>>, %arg6: memref<256x128xbf16, #tpu.memory_space<vmem>>, %arg7: memref<1x128xf32, #tpu.memory_space<vmem>>, %arg8: memref<8x128xbf16, #tpu.memory_space<vmem>>) attributes {dimension_semantics = [#tpu.dimension_semantics<parallel>], iteration_bounds = array<i64: 1>, scalar_prefetch = 0 : i64, scratch_operands = 0 : i64, tpu.core_type = #tpu.core_type<tc>, window_params = [{transform_indices = @transform_0, window_bounds = array<i64: 8, 32>}, {pipeline_mode = #tpu.pipeline_mode<synchronous>, transform_indices = @transform_1, window_bounds = array<i64: 32, 128>}, {pipeline_mode = #tpu.pipeline_mode<synchronous>, transform_indices = @transform_2, window_bounds = array<i64: 1, 128>}, {pipeline_mode = #tpu.pipeline_mode<synchronous>, transform_indices = @transform_3, window_bounds = array<i64: 128, 256>}, {pipeline_mode = #tpu.pipeline_mode<synchronous>, transform_indices = @transform_4, window_bounds = array<i64: 1, 256>}, {pipeline_mode = #tpu.pipeline_mode<synchronous>, transform_indices = @transform_5, window_bounds = array<i64: 256, 128>}, {pipeline_mode = #tpu.pipeline_mode<synchronous>, transform_indices = @transform_6, window_bounds = array<i64: 1, 128>}, {transform_indices = @transform_7, window_bounds = array<i64: 8, 128>}]} {
    %c0 = arith.constant 0 : index
    %c0_0 = arith.constant 0 : index
    %0 = vector.load %arg1[%c0, %c0_0] : memref<8x32xf32, #tpu.memory_space<vmem>>, vector<8x32xf32>
    %1 = arith.truncf %0 : vector<8x32xf32> to vector<8x32xbf16>
    %c0_1 = arith.constant 0 : index
    %c0_2 = arith.constant 0 : index
    %2 = vector.load %arg2[%c0_1, %c0_2] : memref<32x128xbf16, #tpu.memory_space<vmem>>, vector<32x128xbf16>
    %cst = arith.constant dense<0.000000e+00> : vector<8x128xf32>
    %3 = tpu.matmul %1, %2, %cst {dimension_numbers = #tpu.dot_dimension_numbers<[1], [0], [0], [1], [0, 0, 1, 1], [], []>} : vector<8x32xbf16>, vector<32x128xbf16>, vector<8x128xf32> -> vector<8x128xf32>
    %c0_3 = arith.constant 0 : index
    %c0_4 = arith.constant 0 : index
    %4 = vector.load %arg3[%c0_3, %c0_4] : memref<1x128xf32, #tpu.memory_space<vmem>>, vector<1x128xf32>
    %5 = vector.broadcast %4 : vector<1x128xf32> to vector<8x128xf32>
    %6 = arith.addf %3, %5 : vector<8x128xf32>
    %7 = arith.truncf %6 : vector<8x128xf32> to vector<8x128xbf16>
    %cst_5 = arith.constant 5.000000e-01 : bf16
    %8 = vector.broadcast %cst_5 : bf16 to vector<8x128xbf16>
    %9 = arith.mulf %7, %8 : vector<8x128xbf16>
    %10 = math.tanh %9 : vector<8x128xbf16>
    %cst_6 = arith.constant 5.000000e-01 : bf16
    %11 = vector.broadcast %cst_6 : bf16 to vector<8x128xbf16>
    %12 = arith.mulf %10, %11 : vector<8x128xbf16>
    %cst_7 = arith.constant 5.000000e-01 : bf16
    %13 = vector.broadcast %cst_7 : bf16 to vector<8x128xbf16>
    %14 = arith.addf %12, %13 : vector<8x128xbf16>
    %c0_8 = arith.constant 0 : index
    %c0_9 = arith.constant 0 : index
    %15 = vector.load %arg4[%c0_8, %c0_9] : memref<128x256xbf16, #tpu.memory_space<vmem>>, vector<128x256xbf16>
    %cst_10 = arith.constant dense<0.000000e+00> : vector<8x256xf32>
    %16 = tpu.matmul %14, %15, %cst_10 {dimension_numbers = #tpu.dot_dimension_numbers<[1], [0], [0], [1], [0, 0, 1, 1], [], []>} : vector<8x128xbf16>, vector<128x256xbf16>, vector<8x256xf32> -> vector<8x256xf32>
    %c0_11 = arith.constant 0 : index
    %c0_12 = arith.constant 0 : index
    %17 = vector.load %arg5[%c0_11, %c0_12] : memref<1x256xf32, #tpu.memory_space<vmem>>, vector<1x256xf32>
    %18 = vector.broadcast %17 : vector<1x256xf32> to vector<8x256xf32>
    %19 = arith.addf %16, %18 : vector<8x256xf32>
    %20 = arith.truncf %19 : vector<8x256xf32> to vector<8x256xbf16>
    %cst_13 = arith.constant 5.000000e-01 : bf16
    %21 = vector.broadcast %cst_13 : bf16 to vector<8x256xbf16>
    %22 = arith.mulf %20, %21 : vector<8x256xbf16>
    %23 = math.tanh %22 : vector<8x256xbf16>
    %cst_14 = arith.constant 5.000000e-01 : bf16
    %24 = vector.broadcast %cst_14 : bf16 to vector<8x256xbf16>
    %25 = arith.mulf %23, %24 : vector<8x256xbf16>
    %cst_15 = arith.constant 5.000000e-01 : bf16
    %26 = vector.broadcast %cst_15 : bf16 to vector<8x256xbf16>
    %27 = arith.addf %25, %26 : vector<8x256xbf16>
    %c0_16 = arith.constant 0 : index
    %c0_17 = arith.constant 0 : index
    %28 = vector.load %arg6[%c0_16, %c0_17] : memref<256x128xbf16, #tpu.memory_space<vmem>>, vector<256x128xbf16>
    %cst_18 = arith.constant dense<0.000000e+00> : vector<8x128xf32>
    %29 = tpu.matmul %27, %28, %cst_18 {dimension_numbers = #tpu.dot_dimension_numbers<[1], [0], [0], [1], [0, 0, 1, 1], [], []>} : vector<8x256xbf16>, vector<256x128xbf16>, vector<8x128xf32> -> vector<8x128xf32>
    %c0_19 = arith.constant 0 : index
    %c0_20 = arith.constant 0 : index
    %30 = vector.load %arg7[%c0_19, %c0_20] : memref<1x128xf32, #tpu.memory_space<vmem>>, vector<1x128xf32>
    %31 = vector.broadcast %30 : vector<1x128xf32> to vector<8x128xf32>
    %32 = arith.addf %29, %31 : vector<8x128xf32>
    %33 = arith.truncf %32 : vector<8x128xf32> to vector<8x128xbf16>
    %c0_21 = arith.constant 0 : index
    %c0_22 = arith.constant 0 : index
    %34 = vector.load %arg8[%c0_21, %c0_22] : memref<8x128xbf16, #tpu.memory_space<vmem>>, vector<8x128xbf16>
    tpu.vector_store %arg8[%c0_21, %c0_22], %33 {strides = array<i32>} : memref<8x128xbf16, #tpu.memory_space<vmem>>, vector<8x128xbf16>,
    return
  }
  func.func @transform_0(%arg0: i32) -> (i32, i32) {
    %c0_i32 = arith.constant 0 : i32
    %c0_i32_0 = arith.constant 0 : i32
    return %arg0, %c0_i32 : i32, i32
  }
  func.func @transform_1(%arg0: i32) -> (i32, i32) {
    %c0_i32 = arith.constant 0 : i32
    %c0_i32_0 = arith.constant 0 : i32
    %c0_i32_1 = arith.constant 0 : i32
    return %c0_i32, %c0_i32_0 : i32, i32
  }
  func.func @transform_2(%arg0: i32) -> (i32, i32) {
    %c0_i32 = arith.constant 0 : i32
    %c0_i32_0 = arith.constant 0 : i32
    %c0_i32_1 = arith.constant 0 : i32
    return %c0_i32, %c0_i32_0 : i32, i32
  }
  func.func @transform_3(%arg0: i32) -> (i32, i32) {
    %c0_i32 = arith.constant 0 : i32
    %c0_i32_0 = arith.constant 0 : i32
    %c0_i32_1 = arith.constant 0 : i32
    return %c0_i32, %c0_i32_0 : i32, i32
  }
  func.func @transform_4(%arg0: i32) -> (i32, i32) {
    %c0_i32 = arith.constant 0 : i32
    %c0_i32_0 = arith.constant 0 : i32
    %c0_i32_1 = arith.constant 0 : i32
    return %c0_i32, %c0_i32_0 : i32, i32
  }
  func.func @transform_5(%arg0: i32) -> (i32, i32) {
    %c0_i32 = arith.constant 0 : i32
    %c0_i32_0 = arith.constant 0 : i32
    %c0_i32_1 = arith.constant 0 : i32
    return %c0_i32, %c0_i32_0 : i32, i32
  }
  func.func @transform_6(%arg0: i32) -> (i32, i32) {
    %c0_i32 = arith.constant 0 : i32
    %c0_i32_0 = arith.constant 0 : i32
    %c0_i32_1 = arith.constant 0 : i32
    return %c0_i32, %c0_i32_0 : i32, i32
  }
  func.func @transform_7(%arg0: i32) -> (i32, i32) {
    %c0_i32 = arith.constant 0 : i32
    %c0_i32_0 = arith.constant 0 : i32
    return %arg0, %c0_i32 : i32, i32
  }
}

</mosaic_0001>

<llo_original>
// kernel: tpu_custom_call.1
$region0: #{tpu_custom_call.1}
  #allocation0 [shape = 'u32[]', space=smem, size = 0x4, offset = 0x4, fixed_abs, tag = 'smem constant byte address 0x4 - core index']
  #allocation1 [shape = 'u32[144,128]{1,0:T(1,128)}', space=vmem, size = 0x12000, scoped, tag = 'internal scratch']
  %s0 = inlined_call_operand.hbm [shape: f32[8,32], index: 0, kind: input, shape index: {}]
  %s1 = inlined_call_operand.hbm [shape: bf16[32,128], index: 1, kind: input, shape index: {}]
  %s2 = inlined_call_operand.vmem [shape: f32[1,128], index: 2, kind: input, shape index: {}]
  %s3 = inlined_call_operand.hbm [shape: bf16[128,256], index: 3, kind: input, shape index: {}]
  %s4 = inlined_call_operand.vmem [shape: f32[1,256], index: 4, kind: input, shape index: {}]
  %s5 = inlined_call_operand.hbm [shape: bf16[256,128], index: 5, kind: input, shape index: {}]
  %s6 = inlined_call_operand.vmem [shape: f32[1,128], index: 6, kind: input, shape index: {}]
  %s7 = inlined_call_operand.hbm [shape: bf16[8,128], index: 7, kind: output, shape index: {}]
  %s8 = sld [smem:[#allocation0]]
  $region54: #{tpu_custom_call.1} parent=0
    _
  %s10 = ssub.s32 1, %s8
  %s11 = scalar_select 0, %s10, %s8
  $region1: #{tpu_custom_call.1} parent=0
    #allocation2 [shape = 'u8[4096]{0}', space=vmem, size = 0x1000, scoped, tag = 'input window, operand 0, single buffered']
    #allocation3 [shape = 's32[1]{0}', space=sflag, size = 0x4, scoped, tag = 'scoped memory for tpu_custom_call.1']
    #allocation4 [shape = 's32[1]{0}', space=sflag, size = 0x4, scoped, tag = 'scoped memory for tpu_custom_call.1']
    #allocation5 [shape = 'u8[8192]{0}', space=vmem, size = 0x2000, scoped, tag = 'input window, operand 1, single buffered']
    #allocation6 [shape = 's32[1]{0}', space=sflag, size = 0x4, scoped, tag = 'scoped memory for tpu_custom_call.1']
    #allocation7 [shape = 'u8[65536]{0}', space=vmem, size = 0x10000, scoped, tag = 'input window, operand 3, single buffered']
    #allocation8 [shape = 'u8[65536]{0}', space=vmem, size = 0x10000, scoped, tag = 'input window, operand 5, single buffered']
    #allocation9 [shape = 's32[1]{0}', space=sflag, size = 0x4, scoped, tag = 'scoped memory for tpu_custom_call.1']
    #allocation10 [shape = 'u8[2048]{0}', space=vmem, size = 0x800, scoped, tag = 'output window, operand 0, single buffered']
    %12 = vsyncpa [#allocation3], 0
    %13 = vsyncpa [#allocation6], 0
    %14 = vsyncpa [#allocation9], 0
    %15 = vsyncpa [#allocation4], 0
    // Predicated region
    $region2: #{tpu_custom_call.1} parent=1 // pred_check
      _
    $region3: #{tpu_custom_call.1} parent=1 // pred_check_branch
      %17 = sbr.rel (0) target = $region5
    $region4: #{tpu_custom_call.1} parent=1 // pred_region
      %s19 = ssub.s32 128, 128
      %20 = vsyncadd [#allocation3], %s19
      %s22 = sshll.u32 [#allocation2], 4
      %s23 = int_to_ptr.vmem [resolvable:$true] %s22
      %25 = dma.hbm_to_vmem [thread:$0]  %s0, 128, %s23, [#allocation3]
    $region5: #{tpu_custom_call.1} parent=1 // pred_fallthru
      _
    // Predicated region
    $region6: #{tpu_custom_call.1} parent=1 // pred_check
      _
    $region7: #{tpu_custom_call.1} parent=1 // pred_check_branch
      %27 = sbr.rel (0) target = $region9
    $region8: #{tpu_custom_call.1} parent=1 // pred_region
      %s29 = ssub.s32 256, 256
      %30 = vsyncadd [#allocation6], %s29
      %s31 = sshll.u32 [#allocation5], 4
      %s32 = int_to_ptr.vmem [resolvable:$true] %s31
      %37 = dma.hbm_to_vmem [thread:$0]  %s1, 256, %s32, [#allocation6], 64, 64, 4
    $region9: #{tpu_custom_call.1} parent=1 // pred_fallthru
      _
    // Predicated region
    $region10: #{tpu_custom_call.1} parent=1 // pred_check
      _
    $region11: #{tpu_custom_call.1} parent=1 // pred_check_branch
      %39 = sbr.rel (0) target = $region13
    $region12: #{tpu_custom_call.1} parent=1 // pred_region
      _
    $region13: #{tpu_custom_call.1} parent=1 // pred_fallthru
      _
    // Predicated region
    $region14: #{tpu_custom_call.1} parent=1 // pred_check
      _
    $region15: #{tpu_custom_call.1} parent=1 // pred_check_branch
      %41 = sbr.rel (0) target = $region17
    $region16: #{tpu_custom_call.1} parent=1 // pred_region
      %s43 = ssub.s32 2048, 2048
      %44 = vsyncadd [#allocation6], %s43
      %s45 = sshll.u32 [#allocation7], 4
      %s46 = int_to_ptr.vmem [resolvable:$true] %s45
      %51 = dma.hbm_to_vmem [thread:$0]  %s3, 2048, %s46, [#allocation6], 128, 128, 8
    $region17: #{tpu_custom_call.1} parent=1 // pred_fallthru
      _
    // Predicated region
    $region18: #{tpu_custom_call.1} parent=1 // pred_check
      _
    $region19: #{tpu_custom_call.1} parent=1 // pred_check_branch
      %53 = sbr.rel (0) target = $region21
    $region20: #{tpu_custom_call.1} parent=1 // pred_region
      _
    $region21: #{tpu_custom_call.1} parent=1 // pred_fallthru
      _
    // Predicated region
    $region22: #{tpu_custom_call.1} parent=1 // pred_check
      _
    $region23: #{tpu_custom_call.1} parent=1 // pred_check_branch
      %55 = sbr.rel (0) target = $region25
    $region24: #{tpu_custom_call.1} parent=1 // pred_region
      %s57 = ssub.s32 2048, 2048
      %58 = vsyncadd [#allocation9], %s57
      %s59 = sshll.u32 [#allocation8], 4
      %s60 = int_to_ptr.vmem [resolvable:$true] %s59
      %65 = dma.hbm_to_vmem [thread:$0]  %s5, 2048, %s60, [#allocation9], 64, 64, 4
    $region25: #{tpu_custom_call.1} parent=1 // pred_fallthru
      _
    // Predicated region
    $region26: #{tpu_custom_call.1} parent=1 // pred_check
      _
    $region27: #{tpu_custom_call.1} parent=1 // pred_check_branch
      %67 = sbr.rel (0) target = $region29
    $region28: #{tpu_custom_call.1} parent=1 // pred_region
      _
    $region29: #{tpu_custom_call.1} parent=1 // pred_fallthru
      _
    // Predicated region
    $region30: #{tpu_custom_call.1} parent=1 // pred_check
      _
    $region31: #{tpu_custom_call.1} parent=1 // pred_check_branch
      %69 = sbr.rel (0) target = $region33
    $region32: #{tpu_custom_call.1} parent=1 // pred_region
      %70 = dma.done [#allocation3], 128
    $region33: #{tpu_custom_call.1} parent=1 // pred_fallthru
      _
    // Predicated region
    $region34: #{tpu_custom_call.1} parent=1 // pred_check
      _
    $region35: #{tpu_custom_call.1} parent=1 // pred_check_branch
      %72 = sbr.rel (0) target = $region37
    $region36: #{tpu_custom_call.1} parent=1 // pred_region
      %73 = dma.done [#allocation6], 256
    $region37: #{tpu_custom_call.1} parent=1 // pred_fallthru
      _
    // Predicated region
    $region38: #{tpu_custom_call.1} parent=1 // pred_check
      _
    $region39: #{tpu_custom_call.1} parent=1 // pred_check_branch
      %75 = sbr.rel (0) target = $region41
    $region40: #{tpu_custom_call.1} parent=1 // pred_region
      %76 = dma.done [#allocation6], 2048
    $region41: #{tpu_custom_call.1} parent=1 // pred_fallthru
      _
    // Predicated region
    $region42: #{tpu_custom_call.1} parent=1 // pred_check
      _
    $region43: #{tpu_custom_call.1} parent=1 // pred_check_branch
      %78 = sbr.rel (0) target = $region45
    $region44: #{tpu_custom_call.1} parent=1 // pred_region
      %79 = dma.done [#allocation9], 2048
    $region45: #{tpu_custom_call.1} parent=1 // pred_fallthru
      _
    %v82 = vld [vmem:[#allocation2] sm:$0xff]
    %v83 = vpack.c.bf16 %v82, %v82
    %v84 = vld [vmem:[#allocation5] sm:$0xf]
    %v85 = vld [vmem:[#allocation5 + $0x4] sm:$0xf]
    %v86 = vld [vmem:[#allocation5 + $0x8] sm:$0xf]
    %v87 = vld [vmem:[#allocation5 + $0xc] sm:$0xf]
    %v88 = vld [vmem:[%s2] sm:$0x1]
    %v90 = vlaneseq
    %v91 = vshrl.u32 %v90, 7
    %v92 = vsub.s32 0, %v91
    %v93 = vrot.slane %v88, %v92
    %v99 = vunpack.c.l.b16 %v84
    %v100 = vunpack.c.l.b16 %v85
    %v101 = vunpack.c.l.b16 %v86
    %v102 = vunpack.c.l.b16 %v87
    %v103 = vpack.c.b16 %v100, %v99
    %v104 = vpack.c.b16 %v102, %v101
    %vm107 = vcmask 261120
    %v109 = vsel %vm107, %v83, 0
    %111 = vmatprep.subr.bf16.mxu0 0
    %112 = vmatpush1.bf16.msra.mxu0 0
    %113 = vmatprep.subr.bf16.mxu0 0
    %114 = vmatpush1.bf16.msra.mxu0 0
    %115 = vmatprep.subr.bf16.mxu0 0
    %116 = vmatpush1.bf16.msra.mxu0 0
    %117 = vmatprep.subr.bf16.mxu0 0
    %118 = vmatpush1.bf16.msra.mxu0 0
    %119 = vmatprep.subr.bf16.mxu0 0
    %120 = vmatpush1.bf16.msra.mxu0 0
    %121 = vmatprep.subr.bf16.mxu0 0
    %122 = vmatpush1.bf16.msra.mxu0 0
    %123 = vmatprep.subr.bf16.mxu0 0
    %124 = vmatpush1.bf16.msra.mxu0 %v104
    %125 = vmatprep.subr.bf16.mxu0 0
    %126 = vmatpush1.bf16.msra.mxu0 %v103
    %127 = vmatprep.subr.bf16.mxu0 0
    %128 = vmatpush2.bf16.msra.mxu0 0
    %129 = vmatprep.subr.bf16.mxu0 0
    %130 = vmatpush2.bf16.msra.mxu0 0
    %131 = vmatprep.subr.bf16.mxu0 0
    %132 = vmatpush2.bf16.msra.mxu0 0
    %133 = vmatprep.subr.bf16.mxu0 0
    %134 = vmatpush2.bf16.msra.mxu0 0
    %135 = vmatprep.subr.bf16.mxu0 0
    %136 = vmatpush2.bf16.msra.mxu0 0
    %137 = vmatprep.subr.bf16.mxu0 0
    %138 = vmatpush2.bf16.msra.mxu0 0
    %139 = vmatprep.subr.bf16.mxu0 0
    %140 = vmatpush2.bf16.msra.mxu0 0
    %141 = vmatprep.subr.bf16.mxu0 0
    %142 = vmatpush2.bf16.msra.mxu0 0
    %143 = vmatprep.mubr.bf16.mxu0 0
    %144 = vmatmul.mubr.bf16.gmra.mxu0 %v109
    %v145 = vpop.f32.mrf.mxu0
    %v146 = vadd.f32 %v93, %v145
    %v147 = vpop.f32.mrf.mxu0
    %v148 = vpop.f32.mrf.mxu0
    %v149 = vpop.f32.mrf.mxu0
    %150 = vdwg.mxu0
    %v151 = vpack.c.bf16 %v146, %v146
    %v152 = vmul.bf16 %v151, 1056980736
    %v153 = vtanh.bf16.pop %v152
    %v154 = vmul.bf16 %v153, 1056980736
    %v155 = vadd.bf16 %v154, 1056980736
    %v156 = vld [vmem:[#allocation7] sm:$0xff]
    %v157 = vld [vmem:[#allocation7 + $0x8] sm:$0xff]
    %v158 = vld [vmem:[#allocation7 + $0x10] sm:$0xff]
    %v159 = vld [vmem:[#allocation7 + $0x18] sm:$0xff]
    %v160 = vld [vmem:[#allocation7 + $0x20] sm:$0xff]
    %v161 = vld [vmem:[#allocation7 + $0x28] sm:$0xff]
    %v162 = vld [vmem:[#allocation7 + $0x30] sm:$0xff]
    %v163 = vld [vmem:[#allocation7 + $0x38] sm:$0xff]
    %v164 = vld [vmem:[#allocation7 + $0x40] sm:$0xff]
    %v165 = vld [vmem:[#allocation7 + $0x48] sm:$0xff]
    %v166 = vld [vmem:[#allocation7 + $0x50] sm:$0xff]
    %v167 = vld [vmem:[#allocation7 + $0x58] sm:$0xff]
    %v168 = vld [vmem:[#allocation7 + $0x60] sm:$0xff]
    %v169 = vld [vmem:[#allocation7 + $0x68] sm:$0xff]
    %v170 = vld [vmem:[#allocation7 + $0x70] sm:$0xff]
    %v171 = vld [vmem:[#allocation7 + $0x78] sm:$0xff]
    %v172 = vld [vmem:[%s4] sm:$0x3]
    %v174 = vlaneseq
    %v175 = vshrl.u32 %v174, 7
    %v176 = vsub.s32 0, %v175
    %v177 = vrot.slane %v172, %v176
    %v178 = vlaneseq
    %v179 = vshrl.u32 %v178, 7
    %v180 = vsub.s32 1, %v179
    %v181 = vrot.slane %v172, %v180
    %v200 = vunpack.c.l.b16 %v156
    %v201 = vunpack.c.h.b16 %v156
    %v202 = vunpack.c.l.b16 %v157
    %v203 = vunpack.c.h.b16 %v157
    %v204 = vunpack.c.l.b16 %v158
    %v205 = vunpack.c.h.b16 %v158
    %v206 = vunpack.c.l.b16 %v159
    %v207 = vunpack.c.h.b16 %v159
    %v208 = vunpack.c.l.b16 %v160
    %v209 = vunpack.c.h.b16 %v160
    %v210 = vunpack.c.l.b16 %v161
    %v211 = vunpack.c.h.b16 %v161
    %v212 = vunpack.c.l.b16 %v162
    %v213 = vunpack.c.h.b16 %v162
    %v214 = vunpack.c.l.b16 %v163
    %v215 = vunpack.c.h.b16 %v163
    %v216 = vunpack.c.l.b16 %v164
    %v217 = vunpack.c.h.b16 %v164
    %v218 = vunpack.c.l.b16 %v165
    %v219 = vunpack.c.h.b16 %v165
    %v220 = vunpack.c.l.b16 %v166
    %v221 = vunpack.c.h.b16 %v166
    %v222 = vunpack.c.l.b16 %v167
    %v223 = vunpack.c.h.b16 %v167
    %v224 = vunpack.c.l.b16 %v168
    %v225 = vunpack.c.h.b16 %v168
    %v226 = vunpack.c.l.b16 %v169
    %v227 = vunpack.c.h.b16 %v169
    %v228 = vunpack.c.l.b16 %v170
    %v229 = vunpack.c.h.b16 %v170
    %v230 = vunpack.c.l.b16 %v171
    %v231 = vunpack.c.h.b16 %v171
    %v232 = vpack.c.b16 %v202, %v200
    %v233 = vpack.c.b16 %v203, %v201
    %v234 = vpack.c.b16 %v206, %v204
    %v235 = vpack.c.b16 %v207, %v205
    %v236 = vpack.c.b16 %v210, %v208
    %v237 = vpack.c.b16 %v211, %v209
    %v238 = vpack.c.b16 %v214, %v212
    %v239 = vpack.c.b16 %v215, %v213
    %v240 = vpack.c.b16 %v218, %v216
    %v241 = vpack.c.b16 %v219, %v217
    %v242 = vpack.c.b16 %v222, %v220
    %v243 = vpack.c.b16 %v223, %v221
    %v244 = vpack.c.b16 %v226, %v224
    %v245 = vpack.c.b16 %v227, %v225
    %v246 = vpack.c.b16 %v230, %v228
    %v247 = vpack.c.b16 %v231, %v229
    %264 = vmatprep.subr.bf16.mxu0 %v247
    %265 = vmatpush1.bf16.msra.mxu0 %v246
    %266 = vmatprep.subr.bf16.mxu0 %v245
    %267 = vmatpush1.bf16.msra.mxu0 %v244
    %268 = vmatprep.subr.bf16.mxu0 %v243
    %269 = vmatpush1.bf16.msra.mxu0 %v242
    %270 = vmatprep.subr.bf16.mxu0 %v241
    %271 = vmatpush1.bf16.msra.mxu0 %v240
    %272 = vmatprep.subr.bf16.mxu0 %v239
    %273 = vmatpush1.bf16.msra.mxu0 %v238
    %274 = vmatprep.subr.bf16.mxu0 %v237
    %275 = vmatpush1.bf16.msra.mxu0 %v236
    %276 = vmatprep.subr.bf16.mxu0 %v235
    %277 = vmatpush1.bf16.msra.mxu0 %v234
    %278 = vmatprep.subr.bf16.mxu0 %v233
    %279 = vmatpush1.bf16.msra.mxu0 %v232
    %280 = vmatprep.subr.bf16.mxu0 0
    %281 = vmatpush2.bf16.msra.mxu0 0
    %282 = vmatprep.subr.bf16.mxu0 0
    %283 = vmatpush2.bf16.msra.mxu0 0
    %284 = vmatprep.subr.bf16.mxu0 0
    %285 = vmatpush2.bf16.msra.mxu0 0
    %286 = vmatprep.subr.bf16.mxu0 0
    %287 = vmatpush2.bf16.msra.mxu0 0
    %288 = vmatprep.subr.bf16.mxu0 0
    %289 = vmatpush2.bf16.msra.mxu0 0
    %290 = vmatprep.subr.bf16.mxu0 0
    %291 = vmatpush2.bf16.msra.mxu0 0
    %292 = vmatprep.subr.bf16.mxu0 0
    %293 = vmatpush2.bf16.msra.mxu0 0
    %294 = vmatprep.subr.bf16.mxu0 0
    %295 = vmatpush2.bf16.msra.mxu0 0
    %296 = vmatprep.mubr.bf16.mxu0 0
    %297 = vmatmul.mubr.bf16.gmra.mxu0 %v155
    %v298 = vpop.f32.mrf.mxu0
    %v299 = vadd.f32 %v177, %v298
    %v300 = vpop.f32.mrf.mxu0
    %v301 = vadd.f32 %v181, %v300
    %v302 = vpop.f32.mrf.mxu0
    %v303 = vpop.f32.mrf.mxu0
    %304 = vdwg.mxu0
    %v305 = vpack.c.bf16 %v299, %v299
    %v306 = vpack.c.bf16 %v301, %v301
    %v307 = vmul.bf16 %v305, 1056980736
    %v308 = vmul.bf16 %v306, 1056980736
    %v309 = vtanh.bf16.pop %v307
    %v310 = vtanh.bf16.pop %v308
    %v311 = vmul.bf16 %v309, 1056980736
    %v312 = vmul.bf16 %v310, 1056980736
    %v313 = vadd.bf16 %v311, 1056980736
    %v314 = vadd.bf16 %v312, 1056980736
    %v315 = vld [vmem:[#allocation8] sm:$0xf]
    %v316 = vld [vmem:[#allocation8 + $0x4] sm:$0xf]
    %v317 = vld [vmem:[#allocation8 + $0x8] sm:$0xf]
    %v318 = vld [vmem:[#allocation8 + $0xc] sm:$0xf]
    %v319 = vld [vmem:[#allocation8 + $0x10] sm:$0xf]
    %v320 = vld [vmem:[#allocation8 + $0x14] sm:$0xf]
    %v321 = vld [vmem:[#allocation8 + $0x18] sm:$0xf]
    %v322 = vld [vmem:[#allocation8 + $0x1c] sm:$0xf]
    %v323 = vld [vmem:[#allocation8 + $0x20] sm:$0xf]
    %v324 = vld [vmem:[#allocation8 + $0x24] sm:$0xf]
    %v325 = vld [vmem:[#allocation8 + $0x28] sm:$0xf]
    %v326 = vld [vmem:[#allocation8 + $0x2c] sm:$0xf]
    %v327 = vld [vmem:[#allocation8 + $0x30] sm:$0xf]
    %v328 = vld [vmem:[#allocation8 + $0x34] sm:$0xf]
    %v329 = vld [vmem:[#allocation8 + $0x38] sm:$0xf]
    %v330 = vld [vmem:[#allocation8 + $0x3c] sm:$0xf]
    %v331 = vld [vmem:[#allocation8 + $0x40] sm:$0xf]
    %v332 = vld [vmem:[#allocation8 + $0x44] sm:$0xf]
    %v333 = vld [vmem:[#allocation8 + $0x48] sm:$0xf]
    %v334 = vld [vmem:[#allocation8 + $0x4c] sm:$0xf]
    %v335 = vld [vmem:[#allocation8 + $0x50] sm:$0xf]
    %v336 = vld [vmem:[#allocation8 + $0x54] sm:$0xf]
    %v337 = vld [vmem:[#allocation8 + $0x58] sm:$0xf]
    %v338 = vld [vmem:[#allocation8 + $0x5c] sm:$0xf]
    %v339 = vld [vmem:[#allocation8 + $0x60] sm:$0xf]
    %v340 = vld [vmem:[#allocation8 + $0x64] sm:$0xf]
    %v341 = vld [vmem:[#allocation8 + $0x68] sm:$0xf]
    %v342 = vld [vmem:[#allocation8 + $0x6c] sm:$0xf]
    %v343 = vld [vmem:[#allocation8 + $0x70] sm:$0xf]
    %v344 = vld [vmem:[#allocation8 + $0x74] sm:$0xf]
    %v345 = vld [vmem:[#allocation8 + $0x78] sm:$0xf]
    %v346 = vld [vmem:[#allocation8 + $0x7c] sm:$0xf]
    %v347 = vld [vmem:[%s6] sm:$0x1]
    %v349 = vlaneseq
    %v350 = vshrl.u32 %v349, 7
    %v351 = vsub.s32 0, %v350
    %v352 = vrot.slane %v347, %v351
    %v386 = vunpack.c.l.b16 %v315
    %v387 = vunpack.c.l.b16 %v316
    %v388 = vunpack.c.l.b16 %v317
    %v389 = vunpack.c.l.b16 %v318
    %v390 = vunpack.c.l.b16 %v319
    %v391 = vunpack.c.l.b16 %v320
    %v392 = vunpack.c.l.b16 %v321
    %v393 = vunpack.c.l.b16 %v322
    %v394 = vunpack.c.l.b16 %v323
    %v395 = vunpack.c.l.b16 %v324
    %v396 = vunpack.c.l.b16 %v325
    %v397 = vunpack.c.l.b16 %v326
    %v398 = vunpack.c.l.b16 %v327
    %v399 = vunpack.c.l.b16 %v328
    %v400 = vunpack.c.l.b16 %v329
    %v401 = vunpack.c.l.b16 %v330
    %v402 = vunpack.c.l.b16 %v331
    %v403 = vunpack.c.l.b16 %v332
    %v404 = vunpack.c.l.b16 %v333
    %v405 = vunpack.c.l.b16 %v334
    %v406 = vunpack.c.l.b16 %v335
    %v407 = vunpack.c.l.b16 %v336
    %v408 = vunpack.c.l.b16 %v337
    %v409 = vunpack.c.l.b16 %v338
    %v410 = vunpack.c.l.b16 %v339
    %v411 = vunpack.c.l.b16 %v340
    %v412 = vunpack.c.l.b16 %v341
    %v413 = vunpack.c.l.b16 %v342
    %v414 = vunpack.c.l.b16 %v343
    %v415 = vunpack.c.l.b16 %v344
    %v416 = vunpack.c.l.b16 %v345
    %v417 = vunpack.c.l.b16 %v346
    %v418 = vpack.c.b16 %v387, %v386
    %v419 = vpack.c.b16 %v389, %v388
    %v420 = vpack.c.b16 %v391, %v390
    %v421 = vpack.c.b16 %v393, %v392
    %v422 = vpack.c.b16 %v395, %v394
    %v423 = vpack.c.b16 %v397, %v396
    %v424 = vpack.c.b16 %v399, %v398
    %v425 = vpack.c.b16 %v401, %v400
    %v426 = vpack.c.b16 %v403, %v402
    %v427 = vpack.c.b16 %v405, %v404
    %v428 = vpack.c.b16 %v407, %v406
    %v429 = vpack.c.b16 %v409, %v408
    %v430 = vpack.c.b16 %v411, %v410
    %v431 = vpack.c.b16 %v413, %v412
    %v432 = vpack.c.b16 %v415, %v414
    %v433 = vpack.c.b16 %v417, %v416
    %450 = vmatprep.subr.bf16.mxu0 0
    %451 = vmatpush1.bf16.msra.mxu0 %v425
    %452 = vmatprep.subr.bf16.mxu0 0
    %453 = vmatpush1.bf16.msra.mxu0 %v424
    %454 = vmatprep.subr.bf16.mxu0 0
    %455 = vmatpush1.bf16.msra.mxu0 %v423
    %456 = vmatprep.subr.bf16.mxu0 0
    %457 = vmatpush1.bf16.msra.mxu0 %v422
    %458 = vmatprep.subr.bf16.mxu0 0
    %459 = vmatpush1.bf16.msra.mxu0 %v421
    %460 = vmatprep.subr.bf16.mxu0 0
    %461 = vmatpush1.bf16.msra.mxu0 %v420
    %462 = vmatprep.subr.bf16.mxu0 0
    %463 = vmatpush1.bf16.msra.mxu0 %v419
    %464 = vmatprep.subr.bf16.mxu0 0
    %465 = vmatpush1.bf16.msra.mxu0 %v418
    %466 = vmatprep.subr.bf16.mxu0 0
    %467 = vmatpush2.bf16.msra.mxu0 %v433
    %468 = vmatprep.subr.bf16.mxu0 0
    %469 = vmatpush2.bf16.msra.mxu0 %v432
    %470 = vmatprep.subr.bf16.mxu0 0
    %471 = vmatpush2.bf16.msra.mxu0 %v431
    %472 = vmatprep.subr.bf16.mxu0 0
    %473 = vmatpush2.bf16.msra.mxu0 %v430
    %474 = vmatprep.subr.bf16.mxu0 0
    %475 = vmatpush2.bf16.msra.mxu0 %v429
    %476 = vmatprep.subr.bf16.mxu0 0
    %477 = vmatpush2.bf16.msra.mxu0 %v428
    %478 = vmatprep.subr.bf16.mxu0 0
    %479 = vmatpush2.bf16.msra.mxu0 %v427
    %480 = vmatprep.subr.bf16.mxu0 0
    %481 = vmatpush2.bf16.msra.mxu0 %v426
    %482 = vmatprep.mubr.bf16.mxu0 %v314
    %483 = vmatmul.mubr.bf16.gmra.mxu0 %v313
    %v484 = vpop.f32.mrf.mxu0
    %v485 = vadd.f32 %v352, %v484
    %v486 = vpop.f32.mrf.mxu0
    %v487 = vpop.f32.mrf.mxu0
    %v488 = vpop.f32.mrf.mxu0
    %489 = vdwg.mxu0
    %v490 = vpack.c.bf16 %v485, %v485
    %491 = vst [vmem:[#allocation10] sm:$0xf] %v490
    // Predicated region
    $region46: #{tpu_custom_call.1} parent=1 // pred_check
      _
    $region47: #{tpu_custom_call.1} parent=1 // pred_check_branch
      %493 = sbr.rel (0) target = $region49
    $region48: #{tpu_custom_call.1} parent=1 // pred_region
      %s495 = ssub.s32 64, 64
      %496 = vsyncadd [#allocation4], %s495
      %s498 = sshll.u32 [#allocation10], 4
      %s499 = int_to_ptr.vmem [resolvable:$true] %s498
      %501 = dma.vmem_to_hbm [thread:$0]  %s499, 64, %s7, [#allocation4]
    $region49: #{tpu_custom_call.1} parent=1 // pred_fallthru
      _
    // Predicated region
    $region50: #{tpu_custom_call.1} parent=1 // pred_check
      _
    $region51: #{tpu_custom_call.1} parent=1 // pred_check_branch
      %503 = sbr.rel (0) target = $region53
    $region52: #{tpu_custom_call.1} parent=1 // pred_region
      %504 = dma.done [#allocation4], 64
    $region53: #{tpu_custom_call.1} parent=1 // pred_fallthru
      _
    %505 = vsyncpa [#allocation3], 1
    %506 = vsyncpa [#allocation6], 1
    %507 = vsyncpa [#allocation9], 1
    %508 = vsyncpa [#allocation4], 1

</llo_original>
